<compile_context>
chip_gen: v7x
topology: tpu7x:2x2x1
jax: 0.10.0
libtpu: 0.0.40
codegen_flags: <defaults>
</compile_context>

<pallas_src>
import functools

import jax
import jax.numpy as jnp
from jax.experimental import pallas as pl
from jax.experimental.pallas import tpu as pltpu


def _residual_block_kernel(x_ref, m1_ref, m2_ref, bn_ref, out_ref, *, H, C):
    """x_ref/out_ref: (N*H, W*C) f32 compact lane-dense slabs (no halo rows).

    m1_ref/m2_ref: (3, W*C, W*C) bf16 banded weight matrices (one per dy).
    bn_ref: (8, W*C) f32, rows = [gamma1, beta1, gamma2, beta2, 0, 0, 0, 0].
    """
    R, WC = x_ref.shape
    f32 = jnp.float32
    eps = 1e-5
    W = WC // C
    inv_count = 1.0 / float(R * W)            # 1 / (N*H*W)

    # image-boundary masks over rows (row r belongs to image r // H)
    row = jax.lax.broadcasted_iota(jnp.int32, (R, 1), 0)
    not_first = ((row % H) != 0).astype(f32)          # a row above exists in-image
    not_last = ((row % H) != (H - 1)).astype(f32)     # a row below exists in-image
    zrow = jnp.zeros((1, WC), f32)

    def conv3x3(src_bf16, m_ref):
        # Per-tap full-slab matmuls (bf16 operands, f32 accumulation); the
        # dy = -1 / +1 taps are row-shifted results with image-boundary rows
        # masked to zero (SAME padding):  out[r] = a[r-1] + b[r] + c[r+1].
        a = jnp.dot(src_bf16, m_ref[0], preferred_element_type=f32)
        b = jnp.dot(src_bf16, m_ref[1], preferred_element_type=f32)
        c = jnp.dot(src_bf16, m_ref[2], preferred_element_type=f32)
        a_up = jnp.concatenate([zrow, a[: R - 1, :]], axis=0)   # a[r-1], 0 at r=0
        c_dn = jnp.concatenate([c[1:, :], zrow], axis=0)        # c[r+1], 0 at r=R-1
        return b + not_first * a_up + not_last * c_dn

    def channel_reduce_broadcast(s):
        # Cyclic lane-roll doubling tree: after log2(W) steps every column j
        # holds the sum over the W folded positions of its channel (j % C).
        # Runs on the XLU slot; direction of the roll is irrelevant.
        shift = C
        while shift < WC:
            s = s + pltpu.roll(s, shift, axis=1)
            shift *= 2
        return s

    def batchnorm(y, gamma, beta):
        s1 = jnp.sum(y, axis=0, keepdims=True)          # (1, WC) sum
        s2 = jnp.sum(y * y, axis=0, keepdims=True)       # (1, WC) sum of squares
        stats = jnp.concatenate([s1, s2], axis=0)        # (2, WC)
        stats = channel_reduce_broadcast(stats) * inv_count
        mean = stats[0:1, :]
        var = stats[1:2, :] - mean * mean                # biased variance
        scale = gamma * jax.lax.rsqrt(var + eps)         # fold gamma * inv_std
        return (y - mean) * scale + beta

    x = x_ref[...]                                       # (R, WC) f32
    g1, be1 = bn_ref[0:1, :], bn_ref[1:2, :]
    g2, be2 = bn_ref[2:3, :], bn_ref[3:4, :]

    # conv1 -> BN -> ReLU  (matmul operands bf16, everything else f32)
    h = jnp.maximum(
        batchnorm(conv3x3(x.astype(jnp.bfloat16), m1_ref), g1, be1), 0.0)
    # conv2 -> BN -> +residual -> ReLU  (residual added in f32)
    y2 = batchnorm(conv3x3(h.astype(jnp.bfloat16), m2_ref), g2, be2)
    out_ref[...] = jnp.maximum(y2 + x, 0.0)


def _fold_conv_weight(w_flat, W):
    """(9, Cin, Cout) -> (3, W*Cin, W*Cout) banded matrices (one per dy)."""
    Cin, Cout = w_flat.shape[1], w_flat.shape[2]
    w = w_flat.reshape(3, 3, Cin, Cout)                     # (dy, dx, ci, co)
    xi = jnp.arange(W)[:, None, None]
    dx = jnp.arange(3)[None, :, None]
    xo = jnp.arange(W)[None, None, :]
    band = (xi == xo + dx - 1).astype(jnp.float32)          # (W, 3, W)
    m = jnp.einsum("xdz,ydio->yxizo", band, w)              # (3, W, Cin, W, Cout)
    return m.reshape(3, W * Cin, W * Cout)


def residual_block_pallas(x_nchw, params):
    """x_nchw: (N, C, H, W) float32. Returns (N, C, H, W) float32."""
    x = jnp.transpose(x_nchw, (0, 2, 3, 1)).astype(jnp.float32)   # NHWC
    N, H, W, C = x.shape
    Cout = params["w1"].shape[-1]
    assert C == Cout, "downsample=None path requires in_channels == out_channels"
    assert W & (W - 1) == 0, "lane roll-tree BN reduce requires W to be a power of 2"

    WC = W * C
    R = N * H

    # compact lane-dense slab; no halo padding (boundary taps masked in-kernel)
    xin = x.reshape(R, WC)

    # TODO(synk): for large W*C (real ResNet stages) fold only f = ceil(128/C)
    # (v5e) or ceil(256/C) (v6e/v7x bf16) columns per banded matrix and loop over
    # W/f lane groups instead of building (W*Cin, W*Cout) matrices (band density
    # is 3/W, and the matrices grow quadratically with the folded width).
    m1 = _fold_conv_weight(params["w1"], W).astype(jnp.bfloat16)
    m2 = _fold_conv_weight(params["w2"], W).astype(jnp.bfloat16)

    def fold_vec(v):   # (1, C) -> (1, W*C): column x*C + c carries v[c]
        return jnp.tile(v.reshape(1, Cout), (1, W))

    bn = jnp.concatenate(
        [fold_vec(params["g1"]), fold_vec(params["be1"]),
         fold_vec(params["g2"]), fold_vec(params["be2"]),
         jnp.zeros((4, WC), jnp.float32)], axis=0)            # one (8, WC) tile
    # NOTE: conv biases b1/b2 are intentionally NOT passed in -- the batch-stat
    # BN mean subtraction cancels a per-channel constant bias exactly.

    flops = int(12 * R * WC * WC + 32 * R * WC)
    bytes_accessed = int(4 * R * WC * 2 + 2 * 3 * WC * WC * 2 + 4 * 8 * WC)

    # per-generation VMEM cap (v7x has only 64 MiB physical VMEM)
    try:
        vmem_cap = int(getattr(pltpu.get_tpu_info(), "vmem_capacity_bytes"))
    except Exception:
        vmem_cap = 64 << 20
    vmem_limit = int(min(max(8 * bytes_accessed, 16 << 20), int(0.9 * vmem_cap)))

    vmem = pl.BlockSpec(memory_space=pltpu.MemorySpace.VMEM)
    out = pl.pallas_call(
        functools.partial(_residual_block_kernel, H=H, C=C),
        out_shape=jax.ShapeDtypeStruct((R, WC), jnp.float32),
        in_specs=[vmem] * 4,
        out_specs=vmem,
        compiler_params=pltpu.CompilerParams(vmem_limit_bytes=vmem_limit),
        cost_estimate=pl.CostEstimate(
            flops=flops, transcendentals=2 * WC, bytes_accessed=bytes_accessed),
    )(xin, m1, m2, bn)

    # TODO(synk): for real ResNet shapes / v7x, replace this whole-tensor-resident
    # single call with a gridded per-image BlockSpec pipeline and a two-pass
    # BatchNorm (pass 1 accumulates per-channel sum/sumsq across an "arbitrary"
    # grid axis, pass 2 normalizes + residual + ReLU with the image axis marked
    # "parallel" for megacore sharding).
    return jnp.transpose(out.reshape(N, H, W, Cout), (0, 3, 1, 2))


# ----------------------------- pure-JAX reference -----------------------------
def _residual_block_ref(x_nchw, params):
    x = jnp.transpose(x_nchw, (0, 2, 3, 1)).astype(jnp.float32)
    eps = 1e-5

    def conv(xin, w_flat, b):
        w_hwio = w_flat.reshape(3, 3, xin.shape[-1], w_flat.shape[-1])
        y = jax.lax.conv_general_dilated(
            xin, w_hwio, window_strides=(1, 1), padding="SAME",
            dimension_numbers=("NHWC", "HWIO", "NHWC"))
        return y + b.reshape(1, 1, 1, -1)   # bias kept here; cancelled by BN

    def bn(y, g, be):
        mean = jnp.mean(y, axis=(0, 1, 2), keepdims=True)
        var = jnp.mean((y - mean) ** 2, axis=(0, 1, 2), keepdims=True)
        return g.reshape(1, 1, 1, -1) * (y - mean) * jax.lax.rsqrt(var + eps) \
            + be.reshape(1, 1, 1, -1)

    h = jax.nn.relu(bn(conv(x, params["w1"], params["b1"]),
                       params["g1"], params["be1"]))
    h2 = bn(conv(h, params["w2"], params["b2"]), params["g2"], params["be2"])
    out = jax.nn.relu(h2 + x)
    return jnp.transpose(out, (0, 3, 1, 2))


if __name__ == "__main__":
    # batch=2, channels=8, spatial=16x16  ->  folded lane width W*C = 128.
    N, C, H, W = 2, 8, 16, 16
    key = jax.random.PRNGKey(0)
    kx, kw1, kb1, kw2, kb2 = jax.random.split(key, 5)

    x = jax.random.normal(kx, (N, C, H, W), dtype=jnp.float32)

    fan_in = C * 3 * 3
    scale = (2.0 / fan_in) ** 0.5
    params = {
        # conv weights stored as (9, Cin, Cout)  (= (kh*kw, Cin, Cout))
        "w1": scale * jax.random.normal(kw1, (9, C, C), dtype=jnp.float32),
        "b1": 0.01 * jax.random.normal(kb1, (1, C), dtype=jnp.float32),
        "g1": jnp.ones((1, C), jnp.float32),    # BatchNorm gamma init
        "be1": jnp.zeros((1, C), jnp.float32),  # BatchNorm beta init
        "w2": scale * jax.random.normal(kw2, (9, C, C), dtype=jnp.float32),
        "b2": 0.01 * jax.random.normal(kb2, (1, C), dtype=jnp.float32),
        "g2": jnp.ones((1, C), jnp.float32),
        "be2": jnp.zeros((1, C), jnp.float32),
    }

    out = jax.block_until_ready(residual_block_pallas(x, params))
    ref = jax.block_until_ready(_residual_block_ref(x, params))

    assert out.shape == (N, C, H, W)
    # bf16 MXU operands (f32 accumulation) vs. the all-f32 XLA reference:
    # expected max error ~1e-2; 3e-2 keeps >2x margin.
    err = jnp.max(jnp.abs(out - ref))
    assert jnp.allclose(out, ref, atol=3e-2, rtol=3e-2), f"max abs diff {err}"
    print("KERNEL_OK")
</pallas_src>

<mosaic_0001>
module attributes {stable_mosaic.version = 11 : i64} {
  func.func @_residual_block_kernel(%arg0: memref<32x128xf32, #tpu.memory_space<vmem>>, %arg1: memref<3x128x128xbf16, #tpu.memory_space<vmem>>, %arg2: memref<3x128x128xbf16, #tpu.memory_space<vmem>>, %arg3: memref<8x128xf32, #tpu.memory_space<vmem>>, %arg4: memref<32x128xf32, #tpu.memory_space<vmem>>) attributes {dimension_semantics = [], scalar_prefetch = 0 : i64, scratch_operands = 0 : i64, tpu.core_type = #tpu.core_type<tc>} {
    %0 = tpu.iota {dimensions = array<i32: 0>} : vector<32x1xi32>
    %c16_i32 = arith.constant 16 : i32
    %c0_i32 = arith.constant 0 : i32
    %1 = arith.cmpi eq, %c16_i32, %c0_i32 : i32
    %c1_i32 = arith.constant 1 : i32
    %2 = arith.select %1, %c1_i32, %c16_i32 : i32
    %3 = vector.broadcast %2 : i32 to vector<32x1xi32>
    %4 = arith.remsi %0, %3 : vector<32x1xi32>
    %c0_i32_0 = arith.constant 0 : i32
    %5 = vector.broadcast %c0_i32_0 : i32 to vector<32x1xi32>
    %6 = arith.cmpi ne, %4, %5 : vector<32x1xi32>
    %c0_i32_1 = arith.constant 0 : i32
    %7 = vector.broadcast %c0_i32_1 : i32 to vector<32x1xi32>
    %8 = arith.cmpi slt, %4, %7 : vector<32x1xi32>
    %c0_i32_2 = arith.constant 0 : i32
    %9 = arith.cmpi slt, %2, %c0_i32_2 : i32
    %10 = vector.broadcast %9 : i1 to vector<32x1xi1>
    %11 = vector.broadcast %10 : vector<32x1xi1> to vector<32x1xi1>
    %12 = arith.xori %8, %11 : vector<32x1xi1>
    %13 = arith.andi %12, %6 : vector<32x1xi1>
    %14 = vector.broadcast %2 : i32 to vector<32x1xi32>
    %15 = arith.addi %4, %14 : vector<32x1xi32>
    %16 = arith.select %13, %15, %4 : vector<32x1xi1>, vector<32x1xi32>
    %c0_i32_3 = arith.constant 0 : i32
    %17 = vector.broadcast %c0_i32_3 : i32 to vector<32x1xi32>
    %18 = arith.cmpi ne, %16, %17 : vector<32x1xi32>
    %19 = arith.extui %18 : vector<32x1xi1> to vector<32x1xi32>
    %20 = arith.sitofp %19 : vector<32x1xi32> to vector<32x1xf32>
    %c16_i32_4 = arith.constant 16 : i32
    %c0_i32_5 = arith.constant 0 : i32
    %21 = arith.cmpi eq, %c16_i32_4, %c0_i32_5 : i32
    %c1_i32_6 = arith.constant 1 : i32
    %22 = arith.select %21, %c1_i32_6, %c16_i32_4 : i32
    %23 = vector.broadcast %22 : i32 to vector<32x1xi32>
    %24 = arith.remsi %0, %23 : vector<32x1xi32>
    %c0_i32_7 = arith.constant 0 : i32
    %25 = vector.broadcast %c0_i32_7 : i32 to vector<32x1xi32>
    %26 = arith.cmpi ne, %24, %25 : vector<32x1xi32>
    %c0_i32_8 = arith.constant 0 : i32
    %27 = vector.broadcast %c0_i32_8 : i32 to vector<32x1xi32>
    %28 = arith.cmpi slt, %24, %27 : vector<32x1xi32>
    %c0_i32_9 = arith.constant 0 : i32
    %29 = arith.cmpi slt, %22, %c0_i32_9 : i32
    %30 = vector.broadcast %29 : i1 to vector<32x1xi1>
    %31 = vector.broadcast %30 : vector<32x1xi1> to vector<32x1xi1>
    %32 = arith.xori %28, %31 : vector<32x1xi1>
    %33 = arith.andi %32, %26 : vector<32x1xi1>
    %34 = vector.broadcast %22 : i32 to vector<32x1xi32>
    %35 = arith.addi %24, %34 : vector<32x1xi32>
    %36 = arith.select %33, %35, %24 : vector<32x1xi1>, vector<32x1xi32>
    %c15_i32 = arith.constant 15 : i32
    %37 = vector.broadcast %c15_i32 : i32 to vector<32x1xi32>
    %38 = arith.cmpi ne, %36, %37 : vector<32x1xi32>
    %39 = arith.extui %38 : vector<32x1xi1> to vector<32x1xi32>
    %40 = arith.sitofp %39 : vector<32x1xi32> to vector<32x1xf32>
    %cst = arith.constant 0.000000e+00 : f32
    %41 = vector.broadcast %cst : f32 to vector<1x128xf32>
    %c0 = arith.constant 0 : index
    %c0_10 = arith.constant 0 : index
    %42 = vector.load %arg0[%c0, %c0_10] : memref<32x128xf32, #tpu.memory_space<vmem>>, vector<32x128xf32>
    %c0_11 = arith.constant 0 : index
    %c0_12 = arith.constant 0 : index
    %43 = vector.load %arg3[%c0_11, %c0_12] : memref<8x128xf32, #tpu.memory_space<vmem>>, vector<1x128xf32>
    %c1 = arith.constant 1 : index
    %c0_13 = arith.constant 0 : index
    %44 = vector.load %arg3[%c1, %c0_13] : memref<8x128xf32, #tpu.memory_space<vmem>>, vector<1x128xf32>
    %c2 = arith.constant 2 : index
    %c0_14 = arith.constant 0 : index
    %45 = vector.load %arg3[%c2, %c0_14] : memref<8x128xf32, #tpu.memory_space<vmem>>, vector<1x128xf32>
    %c3 = arith.constant 3 : index
    %c0_15 = arith.constant 0 : index
    %46 = vector.load %arg3[%c3, %c0_15] : memref<8x128xf32, #tpu.memory_space<vmem>>, vector<1x128xf32>
    %47 = arith.truncf %42 : vector<32x128xf32> to vector<32x128xbf16>
    %c0_16 = arith.constant 0 : index
    %c0_17 = arith.constant 0 : index
    %c0_18 = arith.constant 0 : index
    %48 = vector.load %arg1[%c0_16, %c0_17, %c0_18] : memref<3x128x128xbf16, #tpu.memory_space<vmem>>, vector<1x128x128xbf16>
    %49 = vector.shape_cast %48 : vector<1x128x128xbf16> to vector<128x128xbf16>
    %cst_19 = arith.constant dense<0.000000e+00> : vector<32x128xf32>
    %50 = tpu.matmul %47, %49, %cst_19 {dimension_numbers = #tpu.dot_dimension_numbers<[1], [0], [0], [1], [0, 0, 1, 1], [], []>} : vector<32x128xbf16>, vector<128x128xbf16>, vector<32x128xf32> -> vector<32x128xf32>
    %c1_20 = arith.constant 1 : index
    %c0_21 = arith.constant 0 : index
    %c0_22 = arith.constant 0 : index
    %51 = vector.load %arg1[%c1_20, %c0_21, %c0_22] : memref<3x128x128xbf16, #tpu.memory_space<vmem>>, vector<1x128x128xbf16>
    %52 = vector.shape_cast %51 : vector<1x128x128xbf16> to vector<128x128xbf16>
    %cst_23 = arith.constant dense<0.000000e+00> : vector<32x128xf32>
    %53 = tpu.matmul %47, %52, %cst_23 {dimension_numbers = #tpu.dot_dimension_numbers<[1], [0], [0], [1], [0, 0, 1, 1], [], []>} : vector<32x128xbf16>, vector<128x128xbf16>, vector<32x128xf32> -> vector<32x128xf32>
    %c2_24 = arith.constant 2 : index
    %c0_25 = arith.constant 0 : index
    %c0_26 = arith.constant 0 : index
    %54 = vector.load %arg1[%c2_24, %c0_25, %c0_26] : memref<3x128x128xbf16, #tpu.memory_space<vmem>>, vector<1x128x128xbf16>
    %55 = vector.shape_cast %54 : vector<1x128x128xbf16> to vector<128x128xbf16>
    %cst_27 = arith.constant dense<0.000000e+00> : vector<32x128xf32>
    %56 = tpu.matmul %47, %55, %cst_27 {dimension_numbers = #tpu.dot_dimension_numbers<[1], [0], [0], [1], [0, 0, 1, 1], [], []>} : vector<32x128xbf16>, vector<128x128xbf16>, vector<32x128xf32> -> vector<32x128xf32>
    %57 = vector.extract_strided_slice %50 {offsets = [0, 0], sizes = [31, 128], strides = [1, 1]} : vector<32x128xf32> to vector<31x128xf32>
    %58 = tpu.concatenate %41, %57 in 0 : vector<1x128xf32>, vector<31x128xf32> -> vector<32x128xf32>
    %59 = vector.extract_strided_slice %56 {offsets = [1, 0], sizes = [31, 128], strides = [1, 1]} : vector<32x128xf32> to vector<31x128xf32>
    %60 = tpu.concatenate %59, %41 in 0 : vector<31x128xf32>, vector<1x128xf32> -> vector<32x128xf32>
    %61 = vector.broadcast %20 : vector<32x1xf32> to vector<32x128xf32>
    %62 = arith.mulf %61, %58 : vector<32x128xf32>
    %63 = arith.addf %53, %62 : vector<32x128xf32>
    %64 = vector.broadcast %40 : vector<32x1xf32> to vector<32x128xf32>
    %65 = arith.mulf %64, %60 : vector<32x128xf32>
    %66 = arith.addf %63, %65 : vector<32x128xf32>
    %cst_28 = arith.constant dense<0.000000e+00> : vector<128xf32>
    %67 = vector.multi_reduction <add>, %66, %cst_28 [0] : vector<32x128xf32> to vector<128xf32>
    %68 = vector.shape_cast %67 : vector<128xf32> to vector<1x128xf32>
    %69 = arith.mulf %66, %66 : vector<32x128xf32>
    %cst_29 = arith.constant dense<0.000000e+00> : vector<128xf32>
    %70 = vector.multi_reduction <add>, %69, %cst_29 [0] : vector<32x128xf32> to vector<128xf32>
    %71 = vector.shape_cast %70 : vector<128xf32> to vector<1x128xf32>
    %72 = tpu.concatenate %68, %71 in 0 : vector<1x128xf32>, vector<1x128xf32> -> vector<2x128xf32>
    %c8_i32 = arith.constant 8 : i32
    %73 = tpu.dynamic_rotate %72 by %c8_i32 dim 1 : vector<2x128xf32>, i32 -> vector<2x128xf32>
    %74 = arith.addf %72, %73 : vector<2x128xf32>
    %c16_i32_30 = arith.constant 16 : i32
    %75 = tpu.dynamic_rotate %74 by %c16_i32_30 dim 1 : vector<2x128xf32>, i32 -> vector<2x128xf32>
    %76 = arith.addf %74, %75 : vector<2x128xf32>
    %c32_i32 = arith.constant 32 : i32
    %77 = tpu.dynamic_rotate %76 by %c32_i32 dim 1 : vector<2x128xf32>, i32 -> vector<2x128xf32>
    %78 = arith.addf %76, %77 : vector<2x128xf32>
    %c64_i32 = arith.constant 64 : i32
    %79 = tpu.dynamic_rotate %78 by %c64_i32 dim 1 : vector<2x128xf32>, i32 -> vector<2x128xf32>
    %80 = arith.addf %78, %79 : vector<2x128xf32>
    %cst_31 = arith.constant 0.001953125 : f32
    %81 = vector.broadcast %cst_31 : f32 to vector<2x128xf32>
    %82 = arith.mulf %80, %81 : vector<2x128xf32>
    %83 = vector.extract_strided_slice %82 {offsets = [0, 0], sizes = [1, 128], strides = [1, 1]} : vector<2x128xf32> to vector<1x128xf32>
    %84 = vector.extract_strided_slice %82 {offsets = [1, 0], sizes = [1, 128], strides = [1, 1]} : vector<2x128xf32> to vector<1x128xf32>
    %85 = arith.mulf %83, %83 : vector<1x128xf32>
    %86 = arith.subf %84, %85 : vector<1x128xf32>
    %cst_32 = arith.constant 9.99999974E-6 : f32
    %87 = vector.broadcast %cst_32 : f32 to vector<1x128xf32>
    %88 = arith.addf %86, %87 : vector<1x128xf32>
    %89 = math.rsqrt %88 : vector<1x128xf32>
    %90 = arith.mulf %43, %89 : vector<1x128xf32>
    %91 = vector.broadcast %83 : vector<1x128xf32> to vector<32x128xf32>
    %92 = arith.subf %66, %91 : vector<32x128xf32>
    %93 = vector.broadcast %90 : vector<1x128xf32> to vector<32x128xf32>
    %94 = arith.mulf %92, %93 : vector<32x128xf32>
    %95 = vector.broadcast %44 : vector<1x128xf32> to vector<32x128xf32>
    %96 = arith.addf %94, %95 : vector<32x128xf32>
    %cst_33 = arith.constant 0.000000e+00 : f32
    %97 = vector.broadcast %cst_33 : f32 to vector<32x128xf32>
    %98 = arith.maximumf %96, %97 : vector<32x128xf32>
    %99 = arith.truncf %98 : vector<32x128xf32> to vector<32x128xbf16>
    %c0_34 = arith.constant 0 : index
    %c0_35 = arith.constant 0 : index
    %c0_36 = arith.constant 0 : index
    %100 = vector.load %arg2[%c0_34, %c0_35, %c0_36] : memref<3x128x128xbf16, #tpu.memory_space<vmem>>, vector<1x128x128xbf16>
    %101 = vector.shape_cast %100 : vector<1x128x128xbf16> to vector<128x128xbf16>
    %cst_37 = arith.constant dense<0.000000e+00> : vector<32x128xf32>
    %102 = tpu.matmul %99, %101, %cst_37 {dimension_numbers = #tpu.dot_dimension_numbers<[1], [0], [0], [1], [0, 0, 1, 1], [], []>} : vector<32x128xbf16>, vector<128x128xbf16>, vector<32x128xf32> -> vector<32x128xf32>
    %c1_38 = arith.constant 1 : index
    %c0_39 = arith.constant 0 : index
    %c0_40 = arith.constant 0 : index
    %103 = vector.load %arg2[%c1_38, %c0_39, %c0_40] : memref<3x128x128xbf16, #tpu.memory_space<vmem>>, vector<1x128x128xbf16>
    %104 = vector.shape_cast %103 : vector<1x128x128xbf16> to vector<128x128xbf16>
    %cst_41 = arith.constant dense<0.000000e+00> : vector<32x128xf32>
    %105 = tpu.matmul %99, %104, %cst_41 {dimension_numbers = #tpu.dot_dimension_numbers<[1], [0], [0], [1], [0, 0, 1, 1], [], []>} : vector<32x128xbf16>, vector<128x128xbf16>, vector<32x128xf32> -> vector<32x128xf32>
    %c2_42 = arith.constant 2 : index
    %c0_43 = arith.constant 0 : index
    %c0_44 = arith.constant 0 : index
    %106 = vector.load %arg2[%c2_42, %c0_43, %c0_44] : memref<3x128x128xbf16, #tpu.memory_space<vmem>>, vector<1x128x128xbf16>
    %107 = vector.shape_cast %106 : vector<1x128x128xbf16> to vector<128x128xbf16>
    %cst_45 = arith.constant dense<0.000000e+00> : vector<32x128xf32>
    %108 = tpu.matmul %99, %107, %cst_45 {dimension_numbers = #tpu.dot_dimension_numbers<[1], [0], [0], [1], [0, 0, 1, 1], [], []>} : vector<32x128xbf16>, vector<128x128xbf16>, vector<32x128xf32> -> vector<32x128xf32>
    %109 = vector.extract_strided_slice %102 {offsets = [0, 0], sizes = [31, 128], strides = [1, 1]} : vector<32x128xf32> to vector<31x128xf32>
    %110 = tpu.concatenate %41, %109 in 0 : vector<1x128xf32>, vector<31x128xf32> -> vector<32x128xf32>
    %111 = vector.extract_strided_slice %108 {offsets = [1, 0], sizes = [31, 128], strides = [1, 1]} : vector<32x128xf32> to vector<31x128xf32>
    %112 = tpu.concatenate %111, %41 in 0 : vector<31x128xf32>, vector<1x128xf32> -> vector<32x128xf32>
    %113 = vector.broadcast %20 : vector<32x1xf32> to vector<32x128xf32>
    %114 = arith.mulf %113, %110 : vector<32x128xf32>
    %115 = arith.addf %105, %114 : vector<32x128xf32>
    %116 = vector.broadcast %40 : vector<32x1xf32> to vector<32x128xf32>
    %117 = arith.mulf %116, %112 : vector<32x128xf32>
    %118 = arith.addf %115, %117 : vector<32x128xf32>
    %cst_46 = arith.constant dense<0.000000e+00> : vector<128xf32>
    %119 = vector.multi_reduction <add>, %118, %cst_46 [0] : vector<32x128xf32> to vector<128xf32>
    %120 = vector.shape_cast %119 : vector<128xf32> to vector<1x128xf32>
    %121 = arith.mulf %118, %118 : vector<32x128xf32>
    %cst_47 = arith.constant dense<0.000000e+00> : vector<128xf32>
    %122 = vector.multi_reduction <add>, %121, %cst_47 [0] : vector<32x128xf32> to vector<128xf32>
    %123 = vector.shape_cast %122 : vector<128xf32> to vector<1x128xf32>
    %124 = tpu.concatenate %120, %123 in 0 : vector<1x128xf32>, vector<1x128xf32> -> vector<2x128xf32>
    %c8_i32_48 = arith.constant 8 : i32
    %125 = tpu.dynamic_rotate %124 by %c8_i32_48 dim 1 : vector<2x128xf32>, i32 -> vector<2x128xf32>
    %126 = arith.addf %124, %125 : vector<2x128xf32>
    %c16_i32_49 = arith.constant 16 : i32
    %127 = tpu.dynamic_rotate %126 by %c16_i32_49 dim 1 : vector<2x128xf32>, i32 -> vector<2x128xf32>
    %128 = arith.addf %126, %127 : vector<2x128xf32>
    %c32_i32_50 = arith.constant 32 : i32
    %129 = tpu.dynamic_rotate %128 by %c32_i32_50 dim 1 : vector<2x128xf32>, i32 -> vector<2x128xf32>
    %130 = arith.addf %128, %129 : vector<2x128xf32>
    %c64_i32_51 = arith.constant 64 : i32
    %131 = tpu.dynamic_rotate %130 by %c64_i32_51 dim 1 : vector<2x128xf32>, i32 -> vector<2x128xf32>
    %132 = arith.addf %130, %131 : vector<2x128xf32>
    %cst_52 = arith.constant 0.001953125 : f32
    %133 = vector.broadcast %cst_52 : f32 to vector<2x128xf32>
    %134 = arith.mulf %132, %133 : vector<2x128xf32>
    %135 = vector.extract_strided_slice %134 {offsets = [0, 0], sizes = [1, 128], strides = [1, 1]} : vector<2x128xf32> to vector<1x128xf32>
    %136 = vector.extract_strided_slice %134 {offsets = [1, 0], sizes = [1, 128], strides = [1, 1]} : vector<2x128xf32> to vector<1x128xf32>
    %137 = arith.mulf %135, %135 : vector<1x128xf32>
    %138 = arith.subf %136, %137 : vector<1x128xf32>
    %cst_53 = arith.constant 9.99999974E-6 : f32
    %139 = vector.broadcast %cst_53 : f32 to vector<1x128xf32>
    %140 = arith.addf %138, %139 : vector<1x128xf32>
    %141 = math.rsqrt %140 : vector<1x128xf32>
    %142 = arith.mulf %45, %141 : vector<1x128xf32>
    %143 = vector.broadcast %135 : vector<1x128xf32> to vector<32x128xf32>
    %144 = arith.subf %118, %143 : vector<32x128xf32>
    %145 = vector.broadcast %142 : vector<1x128xf32> to vector<32x128xf32>
    %146 = arith.mulf %144, %145 : vector<32x128xf32>
    %147 = vector.broadcast %46 : vector<1x128xf32> to vector<32x128xf32>
    %148 = arith.addf %146, %147 : vector<32x128xf32>
    %149 = arith.addf %148, %42 : vector<32x128xf32>
    %cst_54 = arith.constant 0.000000e+00 : f32
    %150 = vector.broadcast %cst_54 : f32 to vector<32x128xf32>
    %151 = arith.maximumf %149, %150 : vector<32x128xf32>
    %c0_55 = arith.constant 0 : index
    %c0_56 = arith.constant 0 : index
    %152 = vector.load %arg4[%c0_55, %c0_56] : memref<32x128xf32, #tpu.memory_space<vmem>>, vector<32x128xf32>
    tpu.vector_store %arg4[%c0_55, %c0_56], %151 {strides = array<i32>} : memref<32x128xf32, #tpu.memory_space<vmem>>, vector<32x128xf32>,
    return
  }
}

</mosaic_0001>

<llo_original>
// kernel: tpu_custom_call.1
$region0: #{tpu_custom_call.1}
  #allocation0 [shape = 'u32[]', space=smem, size = 0x4, offset = 0x4, fixed_abs, tag = 'smem constant byte address 0x4 - core index']
  #allocation1 [shape = 'u32[144,128]{1,0:T(1,128)}', space=vmem, size = 0x12000, scoped, tag = 'internal scratch']
  %s0 = inlined_call_operand.hbm [shape: f32[32,128], index: 0, kind: input, shape index: {}]
  %s1 = inlined_call_operand.hbm [shape: bf16[3,128,128], index: 1, kind: input, shape index: {}]
  %s2 = inlined_call_operand.hbm [shape: bf16[3,128,128], index: 2, kind: input, shape index: {}]
  %s3 = inlined_call_operand.vmem [shape: f32[8,128], index: 3, kind: input, shape index: {}]
  %s4 = inlined_call_operand.hbm [shape: f32[32,128], index: 4, kind: output, shape index: {}]
  %s5 = sld [smem:[#allocation0]]
  $region38: #{tpu_custom_call.1} parent=0
    _
  %s7 = ssub.s32 1, %s5
  %s8 = scalar_select 0, %s7, %s5
  $region1: #{tpu_custom_call.1} parent=0
    #allocation2 [shape = 'u8[16384]{0}', space=vmem, size = 0x4000, scoped, tag = 'input window, operand 0, single buffered']
    #allocation3 [shape = 's32[1]{0}', space=sflag, size = 0x4, scoped, tag = 'scoped memory for tpu_custom_call.1']
    #allocation4 [shape = 's32[1]{0}', space=sflag, size = 0x4, scoped, tag = 'scoped memory for tpu_custom_call.1']
    #allocation5 [shape = 'u8[98304]{0}', space=vmem, size = 0x18000, scoped, tag = 'input window, operand 1, single buffered']
    #allocation6 [shape = 's32[1]{0}', space=sflag, size = 0x4, scoped, tag = 'scoped memory for tpu_custom_call.1']
    #allocation7 [shape = 'u8[98304]{0}', space=vmem, size = 0x18000, scoped, tag = 'input window, operand 2, single buffered']
    #allocation8 [shape = 'u8[16384]{0}', space=vmem, size = 0x4000, scoped, tag = 'output window, operand 0, single buffered']
    %9 = vsyncpa [#allocation3], 0
    %10 = vsyncpa [#allocation6], 0
    %11 = vsyncpa [#allocation4], 0
    // Predicated region
    $region2: #{tpu_custom_call.1} parent=1 // pred_check
      _
    $region3: #{tpu_custom_call.1} parent=1 // pred_check_branch
      %13 = sbr.rel (0) target = $region5
    $region4: #{tpu_custom_call.1} parent=1 // pred_region
      %s15 = ssub.s32 512, 512
      %16 = vsyncadd [#allocation3], %s15
      %s17 = sshll.u32 [#allocation2], 4
      %s18 = int_to_ptr.vmem [resolvable:$true] %s17
      %23 = dma.hbm_to_vmem [thread:$0]  %s0, 512, %s18, [#allocation3], 128, 128, 8
    $region5: #{tpu_custom_call.1} parent=1 // pred_fallthru
      _
    // Predicated region
    $region6: #{tpu_custom_call.1} parent=1 // pred_check
      _
    $region7: #{tpu_custom_call.1} parent=1 // pred_check_branch
      %25 = sbr.rel (0) target = $region9
    $region8: #{tpu_custom_call.1} parent=1 // pred_region
      %s27 = ssub.s32 3072, 3072
      %28 = vsyncadd [#allocation6], %s27
      %s29 = sshll.u32 [#allocation5], 4
      %s30 = int_to_ptr.vmem [resolvable:$true] %s29
      %35 = dma.hbm_to_vmem [thread:$0]  %s1, 3072, %s30, [#allocation6], 64, 64, 4
    $region9: #{tpu_custom_call.1} parent=1 // pred_fallthru
      _
    // Predicated region
    $region10: #{tpu_custom_call.1} parent=1 // pred_check
      _
    $region11: #{tpu_custom_call.1} parent=1 // pred_check_branch
      %37 = sbr.rel (0) target = $region13
    $region12: #{tpu_custom_call.1} parent=1 // pred_region
      %s39 = ssub.s32 3072, 3072
      %40 = vsyncadd [#allocation6], %s39
      %s41 = sshll.u32 [#allocation7], 4
      %s42 = int_to_ptr.vmem [resolvable:$true] %s41
      %47 = dma.hbm_to_vmem [thread:$0]  %s2, 3072, %s42, [#allocation6], 64, 64, 4
    $region13: #{tpu_custom_call.1} parent=1 // pred_fallthru
      _
    // Predicated region
    $region14: #{tpu_custom_call.1} parent=1 // pred_check
      _
    $region15: #{tpu_custom_call.1} parent=1 // pred_check_branch
      %49 = sbr.rel (0) target = $region17
    $region16: #{tpu_custom_call.1} parent=1 // pred_region
      _
    $region17: #{tpu_custom_call.1} parent=1 // pred_fallthru
      _
    // Predicated region
    $region18: #{tpu_custom_call.1} parent=1 // pred_check
      _
    $region19: #{tpu_custom_call.1} parent=1 // pred_check_branch
      %51 = sbr.rel (0) target = $region21
    $region20: #{tpu_custom_call.1} parent=1 // pred_region
      %52 = dma.done [#allocation3], 512
    $region21: #{tpu_custom_call.1} parent=1 // pred_fallthru
      _
    // Predicated region
    $region22: #{tpu_custom_call.1} parent=1 // pred_check
      _
    $region23: #{tpu_custom_call.1} parent=1 // pred_check_branch
      %54 = sbr.rel (0) target = $region25
    $region24: #{tpu_custom_call.1} parent=1 // pred_region
      %55 = dma.done [#allocation6], 3072
    $region25: #{tpu_custom_call.1} parent=1 // pred_fallthru
      _
    // Predicated region
    $region26: #{tpu_custom_call.1} parent=1 // pred_check
      _
    $region27: #{tpu_custom_call.1} parent=1 // pred_check_branch
      %57 = sbr.rel (0) target = $region29
    $region28: #{tpu_custom_call.1} parent=1 // pred_region
      %58 = dma.done [#allocation6], 3072
    $region29: #{tpu_custom_call.1} parent=1 // pred_fallthru
      _
    %v60 = vlaneseq
    %v61 = vshrl.u32 %v60, 7
    %v62 = vadd.s32 %v61, 8
    %v63 = vadd.s32 %v61, 16
    %v64 = vadd.s32 %v61, 24
    %vm65 = vcmp.lt.s32.totalorder %v61, 0
    %v66 = vsub.s32 0, %v61
    %v67 = vsel %vm65, %v66, %v61
    %v68 = vshrl.u32 %v67, 4
    %v69 = vand.u32 %v67, 15
    %v70 = vsub.s32 0, %v69
    %v71 = vsel %vm65, %v70, %v69
    %vm72 = vcmp.lt.s32.totalorder %v62, 0
    %v73 = vsub.s32 0, %v62
    %v74 = vsel %vm72, %v73, %v62
    %v75 = vshrl.u32 %v74, 4
    %v76 = vand.u32 %v74, 15
    %v77 = vsub.s32 0, %v76
    %v78 = vsel %vm72, %v77, %v76
    %vm79 = vcmp.lt.s32.totalorder %v63, 0
    %v80 = vsub.s32 0, %v63
    %v81 = vsel %vm79, %v80, %v63
    %v82 = vshrl.u32 %v81, 4
    %v83 = vand.u32 %v81, 15
    %v84 = vsub.s32 0, %v83
    %v85 = vsel %vm79, %v84, %v83
    %vm86 = vcmp.lt.s32.totalorder %v64, 0
    %v87 = vsub.s32 0, %v64
    %v88 = vsel %vm86, %v87, %v64
    %v89 = vshrl.u32 %v88, 4
    %v90 = vand.u32 %v88, 15
    %v91 = vsub.s32 0, %v90
    %v92 = vsel %vm86, %v91, %v90
    %vm93 = vcmp.ne.s32.totalorder %v71, 0
    %vm94 = vcmp.ne.s32.totalorder %v78, 0
    %vm95 = vcmp.ne.s32.totalorder %v85, 0
    %vm96 = vcmp.ne.s32.totalorder %v92, 0
    %vm97 = vcmp.lt.s32.totalorder %v71, 0
    %vm98 = vcmp.lt.s32.totalorder %v78, 0
    %vm99 = vcmp.lt.s32.totalorder %v85, 0
    %vm100 = vcmp.lt.s32.totalorder %v92, 0
    %vm101 = vmand %vm97, %vm93
    %vm102 = vmand %vm98, %vm94
    %vm103 = vmand %vm99, %vm95
    %vm104 = vmand %vm100, %vm96
    %v105 = vadd.s32 %v71, 16
    %v106 = vadd.s32 %v78, 16
    %v107 = vadd.s32 %v85, 16
    %v108 = vadd.s32 %v92, 16
    %v109 = vsel %vm101, %v105, %v71
    %v110 = vsel %vm102, %v106, %v78
    %v111 = vsel %vm103, %v107, %v85
    %v112 = vsel %vm104, %v108, %v92
    %vm113 = vcmp.ne.s32.totalorder %v109, 0
    %vm114 = vcmp.ne.s32.totalorder %v110, 0
    %vm115 = vcmp.ne.s32.totalorder %v111, 0
    %vm116 = vcmp.ne.s32.totalorder %v112, 0
    %v117 = vsel %vm113, 1, 0
    %v118 = vsel %vm114, 1, 0
    %v119 = vsel %vm115, 1, 0
    %v120 = vsel %vm116, 1, 0
    %v121 = vcvt.s32.f32 %v117
    %v122 = vcvt.s32.f32 %v118
    %v123 = vcvt.s32.f32 %v119
    %v124 = vcvt.s32.f32 %v120
    %vm125 = vcmp.ne.s32.totalorder %v109, 15
    %vm126 = vcmp.ne.s32.totalorder %v110, 15
    %vm127 = vcmp.ne.s32.totalorder %v111, 15
    %vm128 = vcmp.ne.s32.totalorder %v112, 15
    %v129 = vsel %vm125, 1, 0
    %v130 = vsel %vm126, 1, 0
    %v131 = vsel %vm127, 1, 0
    %v132 = vsel %vm128, 1, 0
    %v133 = vcvt.s32.f32 %v129
    %v134 = vcvt.s32.f32 %v130
    %v135 = vcvt.s32.f32 %v131
    %v136 = vcvt.s32.f32 %v132
    %v137 = vld [vmem:[#allocation2] sm:$0xff]
    %v138 = vld [vmem:[#allocation2 + $0x8] sm:$0xff]
    %v139 = vld [vmem:[#allocation2 + $0x10] sm:$0xff]
    %v140 = vld [vmem:[#allocation2 + $0x18] sm:$0xff]
    %v141 = vld [vmem:[%s3] sm:$0x1]
    %v142 = vld [vmem:[%s3 + $0x1] sm:$0x1]
    %v143 = vld [vmem:[%s3 + $0x2] sm:$0x1]
    %v144 = vld [vmem:[%s3 + $0x3] sm:$0x1]
    %v145 = vpack.c.bf16 %v138, %v137
    %v146 = vpack.c.bf16 %v140, %v139
    %v147 = vld [vmem:[#allocation5] sm:$0xf]
    %v148 = vld [vmem:[#allocation5 + $0x4] sm:$0xf]
    %v149 = vld [vmem:[#allocation5 + $0x8] sm:$0xf]
    %v150 = vld [vmem:[#allocation5 + $0xc] sm:$0xf]
    %v151 = vld [vmem:[#allocation5 + $0x10] sm:$0xf]
    %v152 = vld [vmem:[#allocation5 + $0x14] sm:$0xf]
    %v153 = vld [vmem:[#allocation5 + $0x18] sm:$0xf]
    %v154 = vld [vmem:[#allocation5 + $0x1c] sm:$0xf]
    %v155 = vld [vmem:[#allocation5 + $0x20] sm:$0xf]
    %v156 = vld [vmem:[#allocation5 + $0x24] sm:$0xf]
    %v157 = vld [vmem:[#allocation5 + $0x28] sm:$0xf]
    %v158 = vld [vmem:[#allocation5 + $0x2c] sm:$0xf]
    %v159 = vld [vmem:[#allocation5 + $0x30] sm:$0xf]
    %v160 = vld [vmem:[#allocation5 + $0x34] sm:$0xf]
    %v161 = vld [vmem:[#allocation5 + $0x38] sm:$0xf]
    %v162 = vld [vmem:[#allocation5 + $0x3c] sm:$0xf]
    %v179 = vunpack.c.l.b16 %v147
    %v180 = vunpack.c.l.b16 %v148
    %v181 = vunpack.c.l.b16 %v149
    %v182 = vunpack.c.l.b16 %v150
    %v183 = vunpack.c.l.b16 %v151
    %v184 = vunpack.c.l.b16 %v152
    %v185 = vunpack.c.l.b16 %v153
    %v186 = vunpack.c.l.b16 %v154
    %v187 = vunpack.c.l.b16 %v155
    %v188 = vunpack.c.l.b16 %v156
    %v189 = vunpack.c.l.b16 %v157
    %v190 = vunpack.c.l.b16 %v158
    %v191 = vunpack.c.l.b16 %v159
    %v192 = vunpack.c.l.b16 %v160
    %v193 = vunpack.c.l.b16 %v161
    %v194 = vunpack.c.l.b16 %v162
    %v195 = vpack.c.b16 %v180, %v179
    %v196 = vpack.c.b16 %v182, %v181
    %v197 = vpack.c.b16 %v184, %v183
    %v198 = vpack.c.b16 %v186, %v185
    %v199 = vpack.c.b16 %v188, %v187
    %v200 = vpack.c.b16 %v190, %v189
    %v201 = vpack.c.b16 %v192, %v191
    %v202 = vpack.c.b16 %v194, %v193
    %211 = vmatprep.subr.bf16.mxu0 0
    %212 = vmatpush1.bf16.msra.mxu0 %v195
    %213 = vmatprep.subr.bf16.mxu0 0
    %214 = vmatpush1.bf16.msra.mxu0 %v196
    %215 = vmatprep.subr.bf16.mxu0 0
    %216 = vmatpush1.bf16.msra.mxu0 %v197
    %217 = vmatprep.subr.bf16.mxu0 0
    %218 = vmatpush1.bf16.msra.mxu0 %v198
    %219 = vmatprep.subr.bf16.mxu0 0
    %220 = vmatpush1.bf16.msra.mxu0 %v199
    %221 = vmatprep.subr.bf16.mxu0 0
    %222 = vmatpush1.bf16.msra.mxu0 %v200
    %223 = vmatprep.subr.bf16.mxu0 0
    %224 = vmatpush1.bf16.msra.mxu0 %v201
    %225 = vmatprep.subr.bf16.mxu0 0
    %226 = vmatpush1.bf16.msra.mxu0 %v202
    %227 = vmatprep.subr.bf16.mxu0 0
    %228 = vmatpush1.bf16.msra.mxu0 0
    %229 = vmatprep.subr.bf16.mxu0 0
    %230 = vmatpush1.bf16.msra.mxu0 0
    %231 = vmatprep.subr.bf16.mxu0 0
    %232 = vmatpush1.bf16.msra.mxu0 0
    %233 = vmatprep.subr.bf16.mxu0 0
    %234 = vmatpush1.bf16.msra.mxu0 0
    %235 = vmatprep.subr.bf16.mxu0 0
    %236 = vmatpush1.bf16.msra.mxu0 0
    %237 = vmatprep.subr.bf16.mxu0 0
    %238 = vmatpush1.bf16.msra.mxu0 0
    %239 = vmatprep.subr.bf16.mxu0 0
    %240 = vmatpush1.bf16.msra.mxu0 0
    %241 = vmatprep.subr.bf16.mxu0 0
    %242 = vmatpush1.bf16.msra.mxu0 0
    %243 = vmatprep.mubr.bf16.mxu0 0
    %244 = vmatmul.mubr.bf16.gmra.mrb[0].mxu0 %v145
    %v245 = vpop.f32.mrb[0].mxu0
    %v246 = vadd.f32 0.0, %v245
    %v247 = vpop.f32.mrb[0].mxu0
    %v248 = vpop.f32.mrb[0].mxu0
    %v249 = vadd.f32 0.0, %v248
    %v250 = vpop.f32.mrb[0].mxu0
    %251 = vmatprep.mubr.bf16.mxu0 0
    %252 = vmatmul.mubr.bf16.gmra.mrb[0].mxu0 %v146
    %v253 = vpop.f32.mrb[0].mxu0
    %v254 = vadd.f32 0.0, %v253
    %v255 = vpop.f32.mrb[0].mxu0
    %v256 = vpop.f32.mrb[0].mxu0
    %v257 = vadd.f32 0.0, %v256
    %v258 = vpop.f32.mrb[0].mxu0
    %259 = vdwg.mxu0
    %s260 = scalar_lea.vmem [#allocation5], 64
    %v261 = vld [vmem:[%s260] sm:$0xf]
    %v262 = vld [vmem:[%s260 + $0x4] sm:$0xf]
    %v263 = vld [vmem:[%s260 + $0x8] sm:$0xf]
    %v264 = vld [vmem:[%s260 + $0xc] sm:$0xf]
    %v265 = vld [vmem:[%s260 + $0x10] sm:$0xf]
    %v266 = vld [vmem:[%s260 + $0x14] sm:$0xf]
    %v267 = vld [vmem:[%s260 + $0x18] sm:$0xf]
    %v268 = vld [vmem:[%s260 + $0x1c] sm:$0xf]
    %v269 = vld [vmem:[%s260 + $0x20] sm:$0xf]
    %v270 = vld [vmem:[%s260 + $0x24] sm:$0xf]
    %v271 = vld [vmem:[%s260 + $0x28] sm:$0xf]
    %v272 = vld [vmem:[%s260 + $0x2c] sm:$0xf]
    %v273 = vld [vmem:[%s260 + $0x30] sm:$0xf]
    %v274 = vld [vmem:[%s260 + $0x34] sm:$0xf]
    %v275 = vld [vmem:[%s260 + $0x38] sm:$0xf]
    %v276 = vld [vmem:[%s260 + $0x3c] sm:$0xf]
    %s277 = scalar_lea.vmem [#allocation5], 128
    %v278 = vld [vmem:[%s277] sm:$0xf]
    %v279 = vld [vmem:[%s277 + $0x4] sm:$0xf]
    %v280 = vld [vmem:[%s277 + $0x8] sm:$0xf]
    %v281 = vld [vmem:[%s277 + $0xc] sm:$0xf]
    %v282 = vld [vmem:[%s277 + $0x10] sm:$0xf]
    %v283 = vld [vmem:[%s277 + $0x14] sm:$0xf]
    %v284 = vld [vmem:[%s277 + $0x18] sm:$0xf]
    %v285 = vld [vmem:[%s277 + $0x1c] sm:$0xf]
    %v286 = vld [vmem:[%s277 + $0x20] sm:$0xf]
    %v287 = vld [vmem:[%s277 + $0x24] sm:$0xf]
    %v288 = vld [vmem:[%s277 + $0x28] sm:$0xf]
    %v289 = vld [vmem:[%s277 + $0x2c] sm:$0xf]
    %v290 = vld [vmem:[%s277 + $0x30] sm:$0xf]
    %v291 = vld [vmem:[%s277 + $0x34] sm:$0xf]
    %v292 = vld [vmem:[%s277 + $0x38] sm:$0xf]
    %v293 = vld [vmem:[%s277 + $0x3c] sm:$0xf]
    %v310 = vunpack.c.l.b16 %v278
    %v311 = vunpack.c.l.b16 %v279
    %v312 = vunpack.c.l.b16 %v280
    %v313 = vunpack.c.l.b16 %v281
    %v314 = vunpack.c.l.b16 %v282
    %v315 = vunpack.c.l.b16 %v283
    %v316 = vunpack.c.l.b16 %v284
    %v317 = vunpack.c.l.b16 %v285
    %v318 = vunpack.c.l.b16 %v286
    %v319 = vunpack.c.l.b16 %v287
    %v320 = vunpack.c.l.b16 %v288
    %v321 = vunpack.c.l.b16 %v289
    %v322 = vunpack.c.l.b16 %v290
    %v323 = vunpack.c.l.b16 %v291
    %v324 = vunpack.c.l.b16 %v292
    %v325 = vunpack.c.l.b16 %v293
    %v326 = vpack.c.b16 %v311, %v310
    %v327 = vpack.c.b16 %v313, %v312
    %v328 = vpack.c.b16 %v315, %v314
    %v329 = vpack.c.b16 %v317, %v316
    %v330 = vpack.c.b16 %v319, %v318
    %v331 = vpack.c.b16 %v321, %v320
    %v332 = vpack.c.b16 %v323, %v322
    %v333 = vpack.c.b16 %v325, %v324
    %342 = vmatprep.subr.bf16.mxu0 0
    %343 = vmatpush1.bf16.msra.mxu0 %v326
    %344 = vmatprep.subr.bf16.mxu0 0
    %345 = vmatpush1.bf16.msra.mxu0 %v327
    %346 = vmatprep.subr.bf16.mxu0 0
    %347 = vmatpush1.bf16.msra.mxu0 %v328
    %348 = vmatprep.subr.bf16.mxu0 0
    %349 = vmatpush1.bf16.msra.mxu0 %v329
    %350 = vmatprep.subr.bf16.mxu0 0
    %351 = vmatpush1.bf16.msra.mxu0 %v330
    %352 = vmatprep.subr.bf16.mxu0 0
    %353 = vmatpush1.bf16.msra.mxu0 %v331
    %354 = vmatprep.subr.bf16.mxu0 0
    %355 = vmatpush1.bf16.msra.mxu0 %v332
    %356 = vmatprep.subr.bf16.mxu0 0
    %357 = vmatpush1.bf16.msra.mxu0 %v333
    %358 = vmatprep.subr.bf16.mxu0 0
    %359 = vmatpush1.bf16.msra.mxu0 0
    %360 = vmatprep.subr.bf16.mxu0 0
    %361 = vmatpush1.bf16.msra.mxu0 0
    %362 = vmatprep.subr.bf16.mxu0 0
    %363 = vmatpush1.bf16.msra.mxu0 0
    %364 = vmatprep.subr.bf16.mxu0 0
    %365 = vmatpush1.bf16.msra.mxu0 0
    %366 = vmatprep.subr.bf16.mxu0 0
    %367 = vmatpush1.bf16.msra.mxu0 0
    %368 = vmatprep.subr.bf16.mxu0 0
    %369 = vmatpush1.bf16.msra.mxu0 0
    %370 = vmatprep.subr.bf16.mxu0 0
    %371 = vmatpush1.bf16.msra.mxu0 0
    %372 = vmatprep.subr.bf16.mxu0 0
    %373 = vmatpush1.bf16.msra.mxu0 0
    %374 = vmatprep.mubr.bf16.mxu0 0
    %375 = vmatmul.mubr.bf16.gmra.mrb[0].mxu0 %v145
    %v376 = vpop.f32.mrb[0].mxu0
    %v377 = vadd.f32 0.0, %v376
    %v378 = vpop.f32.mrb[0].mxu0
    %v379 = vpop.f32.mrb[0].mxu0
    %v380 = vadd.f32 0.0, %v379
    %v381 = vpop.f32.mrb[0].mxu0
    %382 = vmatprep.mubr.bf16.mxu0 0
    %383 = vmatmul.mubr.bf16.gmra.mrb[0].mxu0 %v146
    %v384 = vpop.f32.mrb[0].mxu0
    %v385 = vadd.f32 0.0, %v384
    %v386 = vpop.f32.mrb[0].mxu0
    %v387 = vpop.f32.mrb[0].mxu0
    %v388 = vadd.f32 0.0, %v387
    %v389 = vpop.f32.mrb[0].mxu0
    %390 = vdwg.mxu0
    %vm395 = vcmask 1040384
    %v396 = vrot.slane %v246, 7
    %v397 = vrot.slane %v249, 7
    %v398 = vsel %vm395, %v396, %v397
    %v399 = vrot.slane %v254, 7
    %v400 = vsel %vm395, %v397, %v399
    %v401 = vrot.slane %v257, 7
    %v402 = vsel %vm395, %v399, %v401
    %v407 = vsel %vm395, 0.0, %v396
    %vm412 = vcmask 1046528
    %v413 = vrot.slane %v377, 1
    %v414 = vrot.slane %v380, 1
    %v415 = vsel %vm412, %v413, %v414
    %v416 = vrot.slane %v385, 1
    %v417 = vsel %vm412, %v414, %v416
    %v418 = vrot.slane %v388, 1
    %v419 = vsel %vm412, %v416, %v418
    %v424 = vsel %vm412, %v418, 0.0
    %v425 = vmul.f32 %v121, %v407
    %v426 = vmul.f32 %v122, %v398
    %v427 = vmul.f32 %v123, %v400
    %v428 = vmul.f32 %v124, %v402
    %v445 = vunpack.c.l.b16 %v261
    %v446 = vunpack.c.l.b16 %v262
    %v447 = vunpack.c.l.b16 %v263
    %v448 = vunpack.c.l.b16 %v264
    %v449 = vunpack.c.l.b16 %v265
    %v450 = vunpack.c.l.b16 %v266
    %v451 = vunpack.c.l.b16 %v267
    %v452 = vunpack.c.l.b16 %v268
    %v453 = vunpack.c.l.b16 %v269
    %v454 = vunpack.c.l.b16 %v270
    %v455 = vunpack.c.l.b16 %v271
    %v456 = vunpack.c.l.b16 %v272
    %v457 = vunpack.c.l.b16 %v273
    %v458 = vunpack.c.l.b16 %v274
    %v459 = vunpack.c.l.b16 %v275
    %v460 = vunpack.c.l.b16 %v276
    %v461 = vpack.c.b16 %v446, %v445
    %v462 = vpack.c.b16 %v448, %v447
    %v463 = vpack.c.b16 %v450, %v449
    %v464 = vpack.c.b16 %v452, %v451
    %v465 = vpack.c.b16 %v454, %v453
    %v466 = vpack.c.b16 %v456, %v455
    %v467 = vpack.c.b16 %v458, %v457
    %v468 = vpack.c.b16 %v460, %v459
    %477 = vmatprep.subr.bf16.mxu0 0
    %478 = vmatpush1.bf16.msra.mxu0 %v461
    %479 = vmatprep.subr.bf16.mxu0 0
    %480 = vmatpush1.bf16.msra.mxu0 %v462
    %481 = vmatprep.subr.bf16.mxu0 0
    %482 = vmatpush1.bf16.msra.mxu0 %v463
    %483 = vmatprep.subr.bf16.mxu0 0
    %484 = vmatpush1.bf16.msra.mxu0 %v464
    %485 = vmatprep.subr.bf16.mxu0 0
    %486 = vmatpush1.bf16.msra.mxu0 %v465
    %487 = vmatprep.subr.bf16.mxu0 0
    %488 = vmatpush1.bf16.msra.mxu0 %v466
    %489 = vmatprep.subr.bf16.mxu0 0
    %490 = vmatpush1.bf16.msra.mxu0 %v467
    %491 = vmatprep.subr.bf16.mxu0 0
    %492 = vmatpush1.bf16.msra.mxu0 %v468
    %493 = vmatprep.subr.bf16.mxu0 0
    %494 = vmatpush1.bf16.msra.mxu0 0
    %495 = vmatprep.subr.bf16.mxu0 0
    %496 = vmatpush1.bf16.msra.mxu0 0
    %497 = vmatprep.subr.bf16.mxu0 0
    %498 = vmatpush1.bf16.msra.mxu0 0
    %499 = vmatprep.subr.bf16.mxu0 0
    %500 = vmatpush1.bf16.msra.mxu0 0
    %501 = vmatprep.subr.bf16.mxu0 0
    %502 = vmatpush1.bf16.msra.mxu0 0
    %503 = vmatprep.subr.bf16.mxu0 0
    %504 = vmatpush1.bf16.msra.mxu0 0
    %505 = vmatprep.subr.bf16.mxu0 0
    %506 = vmatpush1.bf16.msra.mxu0 0
    %507 = vmatprep.subr.bf16.mxu0 0
    %508 = vmatpush1.bf16.msra.mxu0 0
    %509 = vmatprep.mubr.bf16.mxu0 0
    %510 = vmatmul.mubr.bf16.gmra.mrb[0].mxu0 %v145
    %v511 = vpop.f32.mrb[0].mxu0
    %v512 = vadd.f32 %v425, %v511
    %v513 = vpop.f32.mrb[0].mxu0
    %v514 = vpop.f32.mrb[0].mxu0
    %v515 = vadd.f32 %v426, %v514
    %v516 = vpop.f32.mrb[0].mxu0
    %517 = vmatprep.mubr.bf16.mxu0 0
    %518 = vmatmul.mubr.bf16.gmra.mrb[0].mxu0 %v146
    %v519 = vpop.f32.mrb[0].mxu0
    %v520 = vadd.f32 %v427, %v519
    %v521 = vpop.f32.mrb[0].mxu0
    %v522 = vpop.f32.mrb[0].mxu0
    %v523 = vadd.f32 %v428, %v522
    %v524 = vpop.f32.mrb[0].mxu0
    %525 = vdwg.mxu0
    %v526 = vmul.f32 %v133, %v415
    %v527 = vmul.f32 %v134, %v417
    %v528 = vmul.f32 %v135, %v419
    %v529 = vmul.f32 %v136, %v424
    %v530 = vadd.f32 %v512, %v526
    %v531 = vadd.f32 %v515, %v527
    %v532 = vadd.f32 %v520, %v528
    %v533 = vadd.f32 %v523, %v529
    %v534 = vadd.f32 %v530, %v531
    %v535 = vadd.f32 %v534, %v532
    %v536 = vadd.f32 %v535, %v533
    %v537 = vrot.slane %v536, 4
    %v538 = vadd.f32 %v536, %v537
    %v539 = vrot.slane %v538, 2
    %v540 = vadd.f32 %v538, %v539
    %v541 = vrot.slane %v540, 1
    %v542 = vadd.f32 %v540, %v541
    %v543 = vmul.f32 %v530, %v530
    %v544 = vmul.f32 %v531, %v531
    %v545 = vmul.f32 %v532, %v532
    %v546 = vmul.f32 %v533, %v533
    %v547 = vadd.f32 %v543, %v544
    %v548 = vadd.f32 %v547, %v545
    %v549 = vadd.f32 %v548, %v546
    %v550 = vrot.slane %v549, 4
    %v551 = vadd.f32 %v549, %v550
    %v552 = vrot.slane %v551, 2
    %v553 = vadd.f32 %v551, %v552
    %v554 = vrot.slane %v553, 1
    %v555 = vadd.f32 %v553, %v554
    %v556 = vsel %vm395, %v542, %v555
    %557 = vrot.lane.b32.xlu0 %v556, 8
    %v558 = vpop.permute.xlu0 %557
    %v559 = vadd.f32 %v556, %v558
    %560 = vrot.lane.b32.xlu0 %v559, 16
    %v561 = vpop.permute.xlu0 %560
    %v562 = vadd.f32 %v559, %v561
    %563 = vrot.lane.b32.xlu0 %v562, 32
    %v564 = vpop.permute.xlu0 %563
    %v565 = vadd.f32 %v562, %v564
    %566 = vrot.lane.b32.xlu0 %v565, 64
    %v567 = vpop.permute.xlu0 %566
    %v568 = vadd.f32 %v565, %v567
    %v569 = vmul.f32 %v568, 0.001953125
    %v570 = vmul.f32 %v569, %v569
    %v572 = vrot.slane %v570, 7
    %v574 = vsub.f32 %v569, %v572
    %v575 = vadd.f32 %v574, 1e-05
    %v576 = vrsqrt.pop %v575
    %v578 = vrot.slane %v576, 1
    %v580 = vmul.f32 %v141, %v578
    %v581 = vlaneseq
    %v582 = vshrl.u32 %v581, 7
    %v583 = vsub.s32 0, %v582
    %v584 = vrot.slane %v569, %v583
    %v585 = vsub.f32 %v530, %v584
    %v586 = vsub.f32 %v531, %v584
    %v587 = vsub.f32 %v532, %v584
    %v588 = vsub.f32 %v533, %v584
    %v589 = vlaneseq
    %v590 = vshrl.u32 %v589, 7
    %v591 = vsub.s32 0, %v590
    %v592 = vrot.slane %v580, %v591
    %v593 = vmul.f32 %v585, %v592
    %v594 = vmul.f32 %v586, %v592
    %v595 = vmul.f32 %v587, %v592
    %v596 = vmul.f32 %v588, %v592
    %v597 = vlaneseq
    %v598 = vshrl.u32 %v597, 7
    %v599 = vsub.s32 0, %v598
    %v600 = vrot.slane %v142, %v599
    %v601 = vadd.f32 %v593, %v600
    %v602 = vadd.f32 %v594, %v600
    %v603 = vadd.f32 %v595, %v600
    %v604 = vadd.f32 %v596, %v600
    %v605 = vmax.f32 %v601, 0.0
    %v606 = vmax.f32 %v602, 0.0
    %v607 = vmax.f32 %v603, 0.0
    %v608 = vmax.f32 %v604, 0.0
    %v609 = vpack.c.bf16 %v606, %v605
    %v610 = vpack.c.bf16 %v608, %v607
    %v611 = vld [vmem:[#allocation7] sm:$0xf]
    %v612 = vld [vmem:[#allocation7 + $0x4] sm:$0xf]
    %v613 = vld [vmem:[#allocation7 + $0x8] sm:$0xf]
    %v614 = vld [vmem:[#allocation7 + $0xc] sm:$0xf]
    %v615 = vld [vmem:[#allocation7 + $0x10] sm:$0xf]
    %v616 = vld [vmem:[#allocation7 + $0x14] sm:$0xf]
    %v617 = vld [vmem:[#allocation7 + $0x18] sm:$0xf]
    %v618 = vld [vmem:[#allocation7 + $0x1c] sm:$0xf]
    %v619 = vld [vmem:[#allocation7 + $0x20] sm:$0xf]
    %v620 = vld [vmem:[#allocation7 + $0x24] sm:$0xf]
    %v621 = vld [vmem:[#allocation7 + $0x28] sm:$0xf]
    %v622 = vld [vmem:[#allocation7 + $0x2c] sm:$0xf]
    %v623 = vld [vmem:[#allocation7 + $0x30] sm:$0xf]
    %v624 = vld [vmem:[#allocation7 + $0x34] sm:$0xf]
    %v625 = vld [vmem:[#allocation7 + $0x38] sm:$0xf]
    %v626 = vld [vmem:[#allocation7 + $0x3c] sm:$0xf]
    %v643 = vunpack.c.l.b16 %v611
    %v644 = vunpack.c.l.b16 %v612
    %v645 = vunpack.c.l.b16 %v613
    %v646 = vunpack.c.l.b16 %v614
    %v647 = vunpack.c.l.b16 %v615
    %v648 = vunpack.c.l.b16 %v616
    %v649 = vunpack.c.l.b16 %v617
    %v650 = vunpack.c.l.b16 %v618
    %v651 = vunpack.c.l.b16 %v619
    %v652 = vunpack.c.l.b16 %v620
    %v653 = vunpack.c.l.b16 %v621
    %v654 = vunpack.c.l.b16 %v622
    %v655 = vunpack.c.l.b16 %v623
    %v656 = vunpack.c.l.b16 %v624
    %v657 = vunpack.c.l.b16 %v625
    %v658 = vunpack.c.l.b16 %v626
    %v659 = vpack.c.b16 %v644, %v643
    %v660 = vpack.c.b16 %v646, %v645
    %v661 = vpack.c.b16 %v648, %v647
    %v662 = vpack.c.b16 %v650, %v649
    %v663 = vpack.c.b16 %v652, %v651
    %v664 = vpack.c.b16 %v654, %v653
    %v665 = vpack.c.b16 %v656, %v655
    %v666 = vpack.c.b16 %v658, %v657
    %675 = vmatprep.subr.bf16.mxu0 0
    %676 = vmatpush1.bf16.msra.mxu0 %v659
    %677 = vmatprep.subr.bf16.mxu0 0
    %678 = vmatpush1.bf16.msra.mxu0 %v660
    %679 = vmatprep.subr.bf16.mxu0 0
    %680 = vmatpush1.bf16.msra.mxu0 %v661
    %681 = vmatprep.subr.bf16.mxu0 0
    %682 = vmatpush1.bf16.msra.mxu0 %v662
    %683 = vmatprep.subr.bf16.mxu0 0
    %684 = vmatpush1.bf16.msra.mxu0 %v663
    %685 = vmatprep.subr.bf16.mxu0 0
    %686 = vmatpush1.bf16.msra.mxu0 %v664
    %687 = vmatprep.subr.bf16.mxu0 0
    %688 = vmatpush1.bf16.msra.mxu0 %v665
    %689 = vmatprep.subr.bf16.mxu0 0
    %690 = vmatpush1.bf16.msra.mxu0 %v666
    %691 = vmatprep.subr.bf16.mxu0 0
    %692 = vmatpush1.bf16.msra.mxu0 0
    %693 = vmatprep.subr.bf16.mxu0 0
    %694 = vmatpush1.bf16.msra.mxu0 0
    %695 = vmatprep.subr.bf16.mxu0 0
    %696 = vmatpush1.bf16.msra.mxu0 0
    %697 = vmatprep.subr.bf16.mxu0 0
    %698 = vmatpush1.bf16.msra.mxu0 0
    %699 = vmatprep.subr.bf16.mxu0 0
    %700 = vmatpush1.bf16.msra.mxu0 0
    %701 = vmatprep.subr.bf16.mxu0 0
    %702 = vmatpush1.bf16.msra.mxu0 0
    %703 = vmatprep.subr.bf16.mxu0 0
    %704 = vmatpush1.bf16.msra.mxu0 0
    %705 = vmatprep.subr.bf16.mxu0 0
    %706 = vmatpush1.bf16.msra.mxu0 0
    %707 = vmatprep.mubr.bf16.mxu0 0
    %708 = vmatmul.mubr.bf16.gmra.mrb[0].mxu0 %v609
    %v709 = vpop.f32.mrb[0].mxu0
    %v710 = vadd.f32 0.0, %v709
    %v711 = vpop.f32.mrb[0].mxu0
    %v712 = vpop.f32.mrb[0].mxu0
    %v713 = vadd.f32 0.0, %v712
    %v714 = vpop.f32.mrb[0].mxu0
    %715 = vmatprep.mubr.bf16.mxu0 0
    %716 = vmatmul.mubr.bf16.gmra.mrb[0].mxu0 %v610
    %v717 = vpop.f32.mrb[0].mxu0
    %v718 = vadd.f32 0.0, %v717
    %v719 = vpop.f32.mrb[0].mxu0
    %v720 = vpop.f32.mrb[0].mxu0
    %v721 = vadd.f32 0.0, %v720
    %v722 = vpop.f32.mrb[0].mxu0
    %723 = vdwg.mxu0
    %s724 = scalar_lea.vmem [#allocation7], 64
    %v725 = vld [vmem:[%s724] sm:$0xf]
    %v726 = vld [vmem:[%s724 + $0x4] sm:$0xf]
    %v727 = vld [vmem:[%s724 + $0x8] sm:$0xf]
    %v728 = vld [vmem:[%s724 + $0xc] sm:$0xf]
    %v729 = vld [vmem:[%s724 + $0x10] sm:$0xf]
    %v730 = vld [vmem:[%s724 + $0x14] sm:$0xf]
    %v731 = vld [vmem:[%s724 + $0x18] sm:$0xf]
    %v732 = vld [vmem:[%s724 + $0x1c] sm:$0xf]
    %v733 = vld [vmem:[%s724 + $0x20] sm:$0xf]
    %v734 = vld [vmem:[%s724 + $0x24] sm:$0xf]
    %v735 = vld [vmem:[%s724 + $0x28] sm:$0xf]
    %v736 = vld [vmem:[%s724 + $0x2c] sm:$0xf]
    %v737 = vld [vmem:[%s724 + $0x30] sm:$0xf]
    %v738 = vld [vmem:[%s724 + $0x34] sm:$0xf]
    %v739 = vld [vmem:[%s724 + $0x38] sm:$0xf]
    %v740 = vld [vmem:[%s724 + $0x3c] sm:$0xf]
    %s741 = scalar_lea.vmem [#allocation7], 128
    %v742 = vld [vmem:[%s741] sm:$0xf]
    %v743 = vld [vmem:[%s741 + $0x4] sm:$0xf]
    %v744 = vld [vmem:[%s741 + $0x8] sm:$0xf]
    %v745 = vld [vmem:[%s741 + $0xc] sm:$0xf]
    %v746 = vld [vmem:[%s741 + $0x10] sm:$0xf]
    %v747 = vld [vmem:[%s741 + $0x14] sm:$0xf]
    %v748 = vld [vmem:[%s741 + $0x18] sm:$0xf]
    %v749 = vld [vmem:[%s741 + $0x1c] sm:$0xf]
    %v750 = vld [vmem:[%s741 + $0x20] sm:$0xf]
    %v751 = vld [vmem:[%s741 + $0x24] sm:$0xf]
    %v752 = vld [vmem:[%s741 + $0x28] sm:$0xf]
    %v753 = vld [vmem:[%s741 + $0x2c] sm:$0xf]
    %v754 = vld [vmem:[%s741 + $0x30] sm:$0xf]
    %v755 = vld [vmem:[%s741 + $0x34] sm:$0xf]
    %v756 = vld [vmem:[%s741 + $0x38] sm:$0xf]
    %v757 = vld [vmem:[%s741 + $0x3c] sm:$0xf]
    %v774 = vunpack.c.l.b16 %v742
    %v775 = vunpack.c.l.b16 %v743
    %v776 = vunpack.c.l.b16 %v744
    %v777 = vunpack.c.l.b16 %v745
    %v778 = vunpack.c.l.b16 %v746
    %v779 = vunpack.c.l.b16 %v747
    %v780 = vunpack.c.l.b16 %v748
    %v781 = vunpack.c.l.b16 %v749
    %v782 = vunpack.c.l.b16 %v750
    %v783 = vunpack.c.l.b16 %v751
    %v784 = vunpack.c.l.b16 %v752
    %v785 = vunpack.c.l.b16 %v753
    %v786 = vunpack.c.l.b16 %v754
    %v787 = vunpack.c.l.b16 %v755
    %v788 = vunpack.c.l.b16 %v756
    %v789 = vunpack.c.l.b16 %v757
    %v790 = vpack.c.b16 %v775, %v774
    %v791 = vpack.c.b16 %v777, %v776
    %v792 = vpack.c.b16 %v779, %v778
    %v793 = vpack.c.b16 %v781, %v780
    %v794 = vpack.c.b16 %v783, %v782
    %v795 = vpack.c.b16 %v785, %v784
    %v796 = vpack.c.b16 %v787, %v786
    %v797 = vpack.c.b16 %v789, %v788
    %806 = vmatprep.subr.bf16.mxu0 0
    %807 = vmatpush1.bf16.msra.mxu0 %v790
    %808 = vmatprep.subr.bf16.mxu0 0
    %809 = vmatpush1.bf16.msra.mxu0 %v791
    %810 = vmatprep.subr.bf16.mxu0 0
    %811 = vmatpush1.bf16.msra.mxu0 %v792
    %812 = vmatprep.subr.bf16.mxu0 0
    %813 = vmatpush1.bf16.msra.mxu0 %v793
    %814 = vmatprep.subr.bf16.mxu0 0
    %815 = vmatpush1.bf16.msra.mxu0 %v794
    %816 = vmatprep.subr.bf16.mxu0 0
    %817 = vmatpush1.bf16.msra.mxu0 %v795
    %818 = vmatprep.subr.bf16.mxu0 0
    %819 = vmatpush1.bf16.msra.mxu0 %v796
    %820 = vmatprep.subr.bf16.mxu0 0
    %821 = vmatpush1.bf16.msra.mxu0 %v797
    %822 = vmatprep.subr.bf16.mxu0 0
    %823 = vmatpush1.bf16.msra.mxu0 0
    %824 = vmatprep.subr.bf16.mxu0 0
    %825 = vmatpush1.bf16.msra.mxu0 0
    %826 = vmatprep.subr.bf16.mxu0 0
    %827 = vmatpush1.bf16.msra.mxu0 0
    %828 = vmatprep.subr.bf16.mxu0 0
    %829 = vmatpush1.bf16.msra.mxu0 0
    %830 = vmatprep.subr.bf16.mxu0 0
    %831 = vmatpush1.bf16.msra.mxu0 0
    %832 = vmatprep.subr.bf16.mxu0 0
    %833 = vmatpush1.bf16.msra.mxu0 0
    %834 = vmatprep.subr.bf16.mxu0 0
    %835 = vmatpush1.bf16.msra.mxu0 0
    %836 = vmatprep.subr.bf16.mxu0 0
    %837 = vmatpush1.bf16.msra.mxu0 0
    %838 = vmatprep.mubr.bf16.mxu0 0
    %839 = vmatmul.mubr.bf16.gmra.mrb[0].mxu0 %v609
    %v840 = vpop.f32.mrb[0].mxu0
    %v841 = vadd.f32 0.0, %v840
    %v842 = vpop.f32.mrb[0].mxu0
    %v843 = vpop.f32.mrb[0].mxu0
    %v844 = vadd.f32 0.0, %v843
    %v845 = vpop.f32.mrb[0].mxu0
    %846 = vmatprep.mubr.bf16.mxu0 0
    %847 = vmatmul.mubr.bf16.gmra.mrb[0].mxu0 %v610
    %v848 = vpop.f32.mrb[0].mxu0
    %v849 = vadd.f32 0.0, %v848
    %v850 = vpop.f32.mrb[0].mxu0
    %v851 = vpop.f32.mrb[0].mxu0
    %v852 = vadd.f32 0.0, %v851
    %v853 = vpop.f32.mrb[0].mxu0
    %854 = vdwg.mxu0
    %v859 = vrot.slane %v710, 7
    %v860 = vrot.slane %v713, 7
    %v861 = vsel %vm395, %v859, %v860
    %v862 = vrot.slane %v718, 7
    %v863 = vsel %vm395, %v860, %v862
    %v864 = vrot.slane %v721, 7
    %v865 = vsel %vm395, %v862, %v864
    %v870 = vsel %vm395, 0.0, %v859
    %v875 = vrot.slane %v841, 1
    %v876 = vrot.slane %v844, 1
    %v877 = vsel %vm412, %v875, %v876
    %v878 = vrot.slane %v849, 1
    %v879 = vsel %vm412, %v876, %v878
    %v880 = vrot.slane %v852, 1
    %v881 = vsel %vm412, %v878, %v880
    %v886 = vsel %vm412, %v880, 0.0
    %v887 = vmul.f32 %v121, %v870
    %v888 = vmul.f32 %v122, %v861
    %v889 = vmul.f32 %v123, %v863
    %v890 = vmul.f32 %v124, %v865
    %v907 = vunpack.c.l.b16 %v725
    %v908 = vunpack.c.l.b16 %v726
    %v909 = vunpack.c.l.b16 %v727
    %v910 = vunpack.c.l.b16 %v728
    %v911 = vunpack.c.l.b16 %v729
    %v912 = vunpack.c.l.b16 %v730
    %v913 = vunpack.c.l.b16 %v731
    %v914 = vunpack.c.l.b16 %v732
    %v915 = vunpack.c.l.b16 %v733
    %v916 = vunpack.c.l.b16 %v734
    %v917 = vunpack.c.l.b16 %v735
    %v918 = vunpack.c.l.b16 %v736
    %v919 = vunpack.c.l.b16 %v737
    %v920 = vunpack.c.l.b16 %v738
    %v921 = vunpack.c.l.b16 %v739
    %v922 = vunpack.c.l.b16 %v740
    %v923 = vpack.c.b16 %v908, %v907
    %v924 = vpack.c.b16 %v910, %v909
    %v925 = vpack.c.b16 %v912, %v911
    %v926 = vpack.c.b16 %v914, %v913
    %v927 = vpack.c.b16 %v916, %v915
    %v928 = vpack.c.b16 %v918, %v917
    %v929 = vpack.c.b16 %v920, %v919
    %v930 = vpack.c.b16 %v922, %v921
    %939 = vmatprep.subr.bf16.mxu0 0
    %940 = vmatpush1.bf16.msra.mxu0 %v923
    %941 = vmatprep.subr.bf16.mxu0 0
    %942 = vmatpush1.bf16.msra.mxu0 %v924
    %943 = vmatprep.subr.bf16.mxu0 0
    %944 = vmatpush1.bf16.msra.mxu0 %v925
    %945 = vmatprep.subr.bf16.mxu0 0
    %946 = vmatpush1.bf16.msra.mxu0 %v926
    %947 = vmatprep.subr.bf16.mxu0 0
    %948 = vmatpush1.bf16.msra.mxu0 %v927
    %949 = vmatprep.subr.bf16.mxu0 0
    %950 = vmatpush1.bf16.msra.mxu0 %v928
    %951 = vmatprep.subr.bf16.mxu0 0
    %952 = vmatpush1.bf16.msra.mxu0 %v929
    %953 = vmatprep.subr.bf16.mxu0 0
    %954 = vmatpush1.bf16.msra.mxu0 %v930
    %955 = vmatprep.subr.bf16.mxu0 0
    %956 = vmatpush1.bf16.msra.mxu0 0
    %957 = vmatprep.subr.bf16.mxu0 0
    %958 = vmatpush1.bf16.msra.mxu0 0
    %959 = vmatprep.subr.bf16.mxu0 0
    %960 = vmatpush1.bf16.msra.mxu0 0
    %961 = vmatprep.subr.bf16.mxu0 0
    %962 = vmatpush1.bf16.msra.mxu0 0
    %963 = vmatprep.subr.bf16.mxu0 0
    %964 = vmatpush1.bf16.msra.mxu0 0
    %965 = vmatprep.subr.bf16.mxu0 0
    %966 = vmatpush1.bf16.msra.mxu0 0
    %967 = vmatprep.subr.bf16.mxu0 0
    %968 = vmatpush1.bf16.msra.mxu0 0
    %969 = vmatprep.subr.bf16.mxu0 0
    %970 = vmatpush1.bf16.msra.mxu0 0
    %971 = vmatprep.mubr.bf16.mxu0 0
    %972 = vmatmul.mubr.bf16.gmra.mrb[0].mxu0 %v609
    %v973 = vpop.f32.mrb[0].mxu0
    %v974 = vadd.f32 %v887, %v973
    %v975 = vpop.f32.mrb[0].mxu0
    %v976 = vpop.f32.mrb[0].mxu0
    %v977 = vadd.f32 %v888, %v976
    %v978 = vpop.f32.mrb[0].mxu0
    %979 = vmatprep.mubr.bf16.mxu0 0
    %980 = vmatmul.mubr.bf16.gmra.mrb[0].mxu0 %v610
    %v981 = vpop.f32.mrb[0].mxu0
    %v982 = vadd.f32 %v889, %v981
    %v983 = vpop.f32.mrb[0].mxu0
    %v984 = vpop.f32.mrb[0].mxu0
    %v985 = vadd.f32 %v890, %v984
    %v986 = vpop.f32.mrb[0].mxu0
    %987 = vdwg.mxu0
    %v988 = vmul.f32 %v133, %v877
    %v989 = vmul.f32 %v134, %v879
    %v990 = vmul.f32 %v135, %v881
    %v991 = vmul.f32 %v136, %v886
    %v992 = vadd.f32 %v974, %v988
    %v993 = vadd.f32 %v977, %v989
    %v994 = vadd.f32 %v982, %v990
    %v995 = vadd.f32 %v985, %v991
    %v996 = vadd.f32 %v992, %v993
    %v997 = vadd.f32 %v996, %v994
    %v998 = vadd.f32 %v997, %v995
    %v999 = vrot.slane %v998, 4
    %v1000 = vadd.f32 %v998, %v999
    %v1001 = vrot.slane %v1000, 2
    %v1002 = vadd.f32 %v1000, %v1001
    %v1003 = vrot.slane %v1002, 1
    %v1004 = vadd.f32 %v1002, %v1003
    %v1005 = vmul.f32 %v992, %v992
    %v1006 = vmul.f32 %v993, %v993
    %v1007 = vmul.f32 %v994, %v994
    %v1008 = vmul.f32 %v995, %v995
    %v1009 = vadd.f32 %v1005, %v1006
    %v1010 = vadd.f32 %v1009, %v1007
    %v1011 = vadd.f32 %v1010, %v1008
    %v1012 = vrot.slane %v1011, 4
    %v1013 = vadd.f32 %v1011, %v1012
    %v1014 = vrot.slane %v1013, 2
    %v1015 = vadd.f32 %v1013, %v1014
    %v1016 = vrot.slane %v1015, 1
    %v1017 = vadd.f32 %v1015, %v1016
    %v1018 = vsel %vm395, %v1004, %v1017
    %1019 = vrot.lane.b32.xlu0 %v1018, 8
    %v1020 = vpop.permute.xlu0 %1019
    %v1021 = vadd.f32 %v1018, %v1020
    %1022 = vrot.lane.b32.xlu0 %v1021, 16
    %v1023 = vpop.permute.xlu0 %1022
    %v1024 = vadd.f32 %v1021, %v1023
    %1025 = vrot.lane.b32.xlu0 %v1024, 32
    %v1026 = vpop.permute.xlu0 %1025
    %v1027 = vadd.f32 %v1024, %v1026
    %1028 = vrot.lane.b32.xlu0 %v1027, 64
    %v1029 = vpop.permute.xlu0 %1028
    %v1030 = vadd.f32 %v1027, %v1029
    %v1031 = vmul.f32 %v1030, 0.001953125
    %v1032 = vmul.f32 %v1031, %v1031
    %v1034 = vrot.slane %v1032, 7
    %v1036 = vsub.f32 %v1031, %v1034
    %v1037 = vadd.f32 %v1036, 1e-05
    %v1038 = vrsqrt.pop %v1037
    %v1040 = vrot.slane %v1038, 1
    %v1042 = vmul.f32 %v143, %v1040
    %v1043 = vlaneseq
    %v1044 = vshrl.u32 %v1043, 7
    %v1045 = vsub.s32 0, %v1044
    %v1046 = vrot.slane %v1031, %v1045
    %v1047 = vsub.f32 %v992, %v1046
    %v1048 = vsub.f32 %v993, %v1046
    %v1049 = vsub.f32 %v994, %v1046
    %v1050 = vsub.f32 %v995, %v1046
    %v1051 = vlaneseq
    %v1052 = vshrl.u32 %v1051, 7
    %v1053 = vsub.s32 0, %v1052
    %v1054 = vrot.slane %v1042, %v1053
    %v1055 = vmul.f32 %v1047, %v1054
    %v1056 = vmul.f32 %v1048, %v1054
    %v1057 = vmul.f32 %v1049, %v1054
    %v1058 = vmul.f32 %v1050, %v1054
    %v1059 = vlaneseq
    %v1060 = vshrl.u32 %v1059, 7
    %v1061 = vsub.s32 0, %v1060
    %v1062 = vrot.slane %v144, %v1061
    %v1063 = vadd.f32 %v1055, %v1062
    %v1064 = vadd.f32 %v1056, %v1062
    %v1065 = vadd.f32 %v1057, %v1062
    %v1066 = vadd.f32 %v1058, %v1062
    %v1067 = vadd.f32 %v1063, %v137
    %v1068 = vadd.f32 %v1064, %v138
    %v1069 = vadd.f32 %v1065, %v139
    %v1070 = vadd.f32 %v1066, %v140
    %v1071 = vmax.f32 %v1067, 0.0
    %v1072 = vmax.f32 %v1068, 0.0
    %v1073 = vmax.f32 %v1069, 0.0
    %v1074 = vmax.f32 %v1070, 0.0
    %1075 = vst [vmem:[#allocation8] sm:$0xff] %v1071
    %1076 = vst [vmem:[#allocation8 + $0x8] sm:$0xff] %v1072
    %1077 = vst [vmem:[#allocation8 + $0x10] sm:$0xff] %v1073
    %1078 = vst [vmem:[#allocation8 + $0x18] sm:$0xff] %v1074
    // Predicated region
    $region30: #{tpu_custom_call.1} parent=1 // pred_check
      _
    $region31: #{tpu_custom_call.1} parent=1 // pred_check_branch
      %1080 = sbr.rel (0) target = $region33
    $region32: #{tpu_custom_call.1} parent=1 // pred_region
      %s1082 = ssub.s32 512, 512
      %1083 = vsyncadd [#allocation4], %s1082
      %s1084 = sshll.u32 [#allocation8], 4
      %s1085 = int_to_ptr.vmem [resolvable:$true] %s1084
      %1090 = dma.vmem_to_hbm [thread:$0]  %s1085, 512, %s4, [#allocation4], 128, 128, 8
    $region33: #{tpu_custom_call.1} parent=1 // pred_fallthru
      _
    // Predicated region
    $region34: #{tpu_custom_call.1} parent=1 // pred_check
      _
    $region35: #{tpu_custom_call.1} parent=1 // pred_check_branch
      %1092 = sbr.rel (0) target = $region37
    $region36: #{tpu_custom_call.1} parent=1 // pred_region
      %1093 = dma.done [#allocation4], 512
    $region37: #{tpu_custom_call.1} parent=1 // pred_fallthru
      _
    %1094 = vsyncpa [#allocation3], 1
    %1095 = vsyncpa [#allocation6], 1
    %1096 = vsyncpa [#allocation4], 1

</llo_original>
